<compile_context>
chip_gen: v7x
topology: tpu7x:2x2x1
jax: 0.10.0
libtpu: 0.0.40
codegen_flags: <defaults>
</compile_context>

<pallas_src>
import jax
import jax.numpy as jnp
from jax.experimental import pallas as pl
from jax.experimental.pallas import tpu as pltpu


# ---------------------------------------------------------------------------
# Kernels
# ---------------------------------------------------------------------------

def _planar_kernel_packed(params_ref, z_ref, wsel_ref, eu_ref, fz_ref, logdet_ref):
    """Lane-dense path: `pack` latent rows packed into each 128-lane row.

    params_ref : SMEM (2,)  = [b, muw]
    z_ref      : (TB, pack*D)   pack original rows per packed row
    wsel_ref   : (pack*D, pack) block-diagonal copies of w  (zwb via MXU)
    eu_ref     : (pack, pack*D) block-diagonal copies of uhat (expand via MXU)
    fz_ref     : (TB, pack*D)
    logdet_ref : (TB, pack)
    """
    b = params_ref[0]
    muw = params_ref[1]
    z = z_ref[...]                                               # (TB, 128)

    # zwb[r, p] = z_row(r*pack+p) . w  -- cross-lane reduction done on the MXU.
    zwb = jnp.dot(z, wsel_ref[...],
                  preferred_element_type=jnp.float32,
                  precision=jax.lax.Precision.HIGHEST) + b       # (TB, pack)
    t = jnp.tanh(zwb)                                            # (TB, pack)

    # f_z = z + uhat * tanh(zwb); t is expanded back to lanes (scaled by uhat)
    # with a second tiny matmul, keeping the store fully lane-dense.
    fz_ref[...] = z + jnp.dot(t, eu_ref[...],
                              preferred_element_type=jnp.float32,
                              precision=jax.lax.Precision.HIGHEST)

    # psi_u = sum((1 - t^2) * w * uhat) = (1 - t^2) * (w . uhat) = (1 - t^2)*muw
    psi_u = (1.0 - t * t) * muw
    logdet_ref[...] = jnp.log(jnp.abs(1.0 + psi_u) + 1e-8)


def _planar_kernel_rowwise(params_ref, z_ref, w_ref, uhat_ref, fz_ref, logdet_ref):
    """Fallback path for latent_dim that does not pack into 128 lanes."""
    b = params_ref[0]
    muw = params_ref[1]
    z = z_ref[...]                                               # (TB, D)
    w = w_ref[...]                                               # (1, D)
    uhat = uhat_ref[...]                                         # (1, D)

    zwb = jnp.sum(z * w, axis=1, keepdims=True) + b              # (TB, 1)
    t = jnp.tanh(zwb)
    fz_ref[...] = z + uhat * t
    psi_u = (1.0 - t * t) * muw
    logdet_ref[...] = jnp.log(jnp.abs(1.0 + psi_u) + 1e-8)


# ---------------------------------------------------------------------------
# Wrapper
# ---------------------------------------------------------------------------

def _round_up(x, m):
    return (x + m - 1) // m * m


def planar_normalizing_flow(z, u, w, b, *, block_rows=4096):
    """z: (B, D); u, w: (1, D); b: (1, 1)  ->  (f_z (B, D) f32, logdet (B,) f32).

    `cond` of the PyTorch module is unused in the cond_params=False branch.
    block_rows = batch tile measured in *packed* rows (pack*block_rows
    original rows when D packs into 128 lanes).
    """
    z = z.astype(jnp.float32)
    u = u.astype(jnp.float32)
    w = w.astype(jnp.float32)
    b = b.astype(jnp.float32)
    B, D = z.shape

    # ---- batch-independent parameter math (O(D); hoisted out of the kernel) --
    uw = jnp.sum(u * w, axis=1, keepdims=True)                        # (1, 1)
    muw = -1.0 + jax.nn.softplus(uw)                                  # (1, 1)
    uhat = u + (muw - uw) * w / jnp.sum(w * w, axis=1, keepdims=True) # (1, D)
    params = jnp.concatenate([b.reshape(-1), muw.reshape(-1)])        # (2,) SMEM

    # How many latent rows fit lane-dense into one 128-lane vector row.
    pack = (128 // D) if (D < 128 and 128 % D == 0) else 1

    block_rows = max(8, (block_rows // 8) * 8)
    smem_spec = pl.BlockSpec(memory_space=pltpu.MemorySpace.SMEM)
    cparams = pltpu.CompilerParams(
        dimension_semantics=("parallel",),
        vmem_limit_bytes=32 * 1024 * 1024,   # double-buffered z+f_z tiles << 32 MiB
    )

    if pack > 1:
        L = pack * D                                  # exactly 128 lanes
        B_pad = _round_up(B, pack * 8)
        R = B_pad // pack                             # packed rows (multiple of 8)
        z_p = jnp.pad(z, ((0, B_pad - B), (0, 0))).reshape(R, L)   # free reshape

        # Tiny block-diagonal selection / expansion matrices (built once).
        seg = jnp.repeat(jnp.eye(pack, dtype=jnp.float32), D, axis=0)   # (L, pack)
        wsel = seg * jnp.tile(w[0], pack)[:, None]                      # (L, pack)
        eu = seg.T * jnp.tile(uhat[0], pack)[None, :]                   # (pack, L)

        tbp = min(block_rows, R)
        grid = (pl.cdiv(R, tbp),)                     # ragged last block is masked

        fz_p, logdet_p = pl.pallas_call(
            _planar_kernel_packed,
            out_shape=(
                jax.ShapeDtypeStruct((R, L), jnp.float32),
                jax.ShapeDtypeStruct((R, pack), jnp.float32),
            ),
            grid=grid,
            in_specs=[
                smem_spec,                                        # [b, muw]
                pl.BlockSpec((tbp, L), lambda i: (i, 0)),         # z (lane-dense)
                pl.BlockSpec((L, pack), lambda i: (0, 0)),        # wsel (shared)
                pl.BlockSpec((pack, L), lambda i: (0, 0)),        # eu   (shared)
            ],
            out_specs=(
                pl.BlockSpec((tbp, L), lambda i: (i, 0)),         # f_z (lane-dense)
                pl.BlockSpec((tbp, pack), lambda i: (i, 0)),      # logdet
            ),
            compiler_params=cparams,
        )(params, z_p, wsel, eu)

        fz = fz_p.reshape(B_pad, D)[:B]
        logdet = logdet_p.reshape(B_pad)[:B]
    else:
        # Generic path: one latent row per vector row (D doesn't pack into 128).
        B_pad = _round_up(B, 8)
        z_p = jnp.pad(z, ((0, B_pad - B), (0, 0)))
        tb = min(block_rows, B_pad)
        grid = (pl.cdiv(B_pad, tb),)

        fz_p, logdet_p = pl.pallas_call(
            _planar_kernel_rowwise,
            out_shape=(
                jax.ShapeDtypeStruct((B_pad, D), jnp.float32),
                jax.ShapeDtypeStruct((B_pad, 1), jnp.float32),
            ),
            grid=grid,
            in_specs=[
                smem_spec,                                        # [b, muw]
                pl.BlockSpec((tb, D), lambda i: (i, 0)),          # z
                pl.BlockSpec((1, D), lambda i: (0, 0)),           # w
                pl.BlockSpec((1, D), lambda i: (0, 0)),           # uhat
            ],
            out_specs=(
                pl.BlockSpec((tb, D), lambda i: (i, 0)),          # f_z
                pl.BlockSpec((tb, 1), lambda i: (i, 0)),          # logdet
            ),
            compiler_params=cparams,
        )(params, z_p, w, uhat)

        fz = fz_p[:B]
        logdet = logdet_p[:B, 0]

    return fz, logdet


def planar_normalizing_flow_ref(z, u, w, b):
    """Pure-JAX reference mirroring the PyTorch forward exactly (incl. psi path)."""
    z = z.astype(jnp.float32)
    u = u.astype(jnp.float32)
    w = w.astype(jnp.float32)
    b = b.astype(jnp.float32)
    uw = jnp.sum(u * w, axis=1, keepdims=True)
    muw = -1.0 + jax.nn.softplus(uw)
    uhat = u + (muw - uw) * w / jnp.sum(w ** 2, axis=1, keepdims=True)
    zwb = jnp.sum(z * w, axis=1, keepdims=True) + b
    f_z = z + uhat * jnp.tanh(zwb)
    psi = (1.0 - jnp.tanh(zwb) ** 2) * w
    psi_u = jnp.sum(psi * uhat, axis=1)
    logdet = jnp.log(jnp.abs(1.0 + psi_u) + 1e-8)
    return f_z, logdet


if __name__ == "__main__":
    # Shapes from the module's forward contract:
    #   z: (n_batch, latent_dim), cond: (n_batch, cond_dim) (unused, cond_params=False).
    batch, latent_dim, cond_dim = 2, 32, 16

    key = jax.random.PRNGKey(0)
    kz, kc, ku, kw, kb, kz_big, kz_odd = jax.random.split(key, 7)

    z = jax.random.normal(kz, (batch, latent_dim), dtype=jnp.float32)
    cond = jax.random.normal(kc, (batch, cond_dim), dtype=jnp.float32)  # unused

    # Deterministic params matching u.data.uniform_(-0.01, 0.01) etc.
    u = jax.random.uniform(ku, (1, latent_dim), minval=-0.01, maxval=0.01, dtype=jnp.float32)
    w = jax.random.uniform(kw, (1, latent_dim), minval=-0.01, maxval=0.01, dtype=jnp.float32)
    b = jax.random.uniform(kb, (1, 1), minval=-0.01, maxval=0.01, dtype=jnp.float32)

    # Tolerance slightly looser than f32 eps: MXU pass structure differs from
    # the reference's VPU reduction ordering.
    TOL = dict(atol=1e-4, rtol=1e-4)

    # --- small case (module's nominal shapes) ---
    f_z, logdet = planar_normalizing_flow(z, u, w, b)
    jax.block_until_ready((f_z, logdet))
    f_z_ref, logdet_ref = planar_normalizing_flow_ref(z, u, w, b)
    assert f_z.shape == (batch, latent_dim) and logdet.shape == (batch,)
    assert jnp.allclose(f_z, f_z_ref, **TOL)
    assert jnp.allclose(logdet, logdet_ref, **TOL)

    # --- larger batch exercising the tiled, pipelined, parallel grid ---
    big_batch = 4096
    z_big = jax.random.normal(kz_big, (big_batch, latent_dim), dtype=jnp.float32)
    f_z_b, logdet_b = planar_normalizing_flow(z_big, u, w, b, block_rows=256)
    jax.block_until_ready((f_z_b, logdet_b))
    f_z_b_ref, logdet_b_ref = planar_normalizing_flow_ref(z_big, u, w, b)
    assert f_z_b.shape == (big_batch, latent_dim) and logdet_b.shape == (big_batch,)
    assert jnp.allclose(f_z_b, f_z_b_ref, **TOL)
    assert jnp.allclose(logdet_b, logdet_b_ref, **TOL)

    # --- awkward batch size exercising padding + slicing ---
    odd_batch = 37
    z_odd = jax.random.normal(kz_odd, (odd_batch, latent_dim), dtype=jnp.float32)
    f_z_o, logdet_o = planar_normalizing_flow(z_odd, u, w, b)
    jax.block_until_ready((f_z_o, logdet_o))
    f_z_o_ref, logdet_o_ref = planar_normalizing_flow_ref(z_odd, u, w, b)
    assert f_z_o.shape == (odd_batch, latent_dim) and logdet_o.shape == (odd_batch,)
    assert jnp.allclose(f_z_o, f_z_o_ref, **TOL)
    assert jnp.allclose(logdet_o, logdet_o_ref, **TOL)

    print("KERNEL_OK")
</pallas_src>

<mosaic_0001>
module attributes {stable_mosaic.version = 11 : i64} {
  func.func @_planar_kernel_packed(%arg0: i32, %arg1: memref<2xf32, #tpu.memory_space<smem>>, %arg2: memref<8x128xf32, #tpu.memory_space<vmem>>, %arg3: memref<128x4xf32, #tpu.memory_space<vmem>>, %arg4: memref<4x128xf32, #tpu.memory_space<vmem>>, %arg5: memref<8x128xf32, #tpu.memory_space<vmem>>, %arg6: memref<8x4xf32, #tpu.memory_space<vmem>>) attributes {dimension_semantics = [#tpu.dimension_semantics<parallel>], iteration_bounds = array<i64: 1>, scalar_prefetch = 0 : i64, scratch_operands = 0 : i64, tpu.core_type = #tpu.core_type<tc>, window_params = [{transform_indices = @transform_0, window_bounds = array<i64: 2>}, {transform_indices = @transform_1, window_bounds = array<i64: 8, 128>}, {pipeline_mode = #tpu.pipeline_mode<synchronous>, transform_indices = @transform_2, window_bounds = array<i64: 128, 4>}, {pipeline_mode = #tpu.pipeline_mode<synchronous>, transform_indices = @transform_3, window_bounds = array<i64: 4, 128>}, {transform_indices = @transform_4, window_bounds = array<i64: 8, 128>}, {transform_indices = @transform_5, window_bounds = array<i64: 8, 4>}]} {
    %c0 = arith.constant 0 : index
    %0 = memref.load %arg1[%c0] : memref<2xf32, #tpu.memory_space<smem>>
    %c1 = arith.constant 1 : index
    %1 = memref.load %arg1[%c1] : memref<2xf32, #tpu.memory_space<smem>>
    %c0_0 = arith.constant 0 : index
    %c0_1 = arith.constant 0 : index
    %2 = vector.load %arg2[%c0_0, %c0_1] : memref<8x128xf32, #tpu.memory_space<vmem>>, vector<8x128xf32>
    %c0_2 = arith.constant 0 : index
    %c0_3 = arith.constant 0 : index
    %3 = vector.load %arg3[%c0_2, %c0_3] : memref<128x4xf32, #tpu.memory_space<vmem>>, vector<128x4xf32>
    %cst = arith.constant dense<0.000000e+00> : vector<8x4xf32>
    %4 = tpu.matmul %2, %3, %cst {dimension_numbers = #tpu.dot_dimension_numbers<[1], [0], [0], [1], [0, 0, 1, 1], [], []>, precision = #tpu.contract_precision<fp32>} : vector<8x128xf32>, vector<128x4xf32>, vector<8x4xf32> -> vector<8x4xf32>
    %5 = vector.broadcast %0 : f32 to vector<8x4xf32>
    %6 = arith.addf %4, %5 : vector<8x4xf32>
    %7 = math.tanh %6 : vector<8x4xf32>
    %c0_4 = arith.constant 0 : index
    %c0_5 = arith.constant 0 : index
    %8 = vector.load %arg4[%c0_4, %c0_5] : memref<4x128xf32, #tpu.memory_space<vmem>>, vector<4x128xf32>
    %cst_6 = arith.constant dense<0.000000e+00> : vector<8x128xf32>
    %9 = tpu.matmul %7, %8, %cst_6 {dimension_numbers = #tpu.dot_dimension_numbers<[1], [0], [0], [1], [0, 0, 1, 1], [], []>, precision = #tpu.contract_precision<fp32>} : vector<8x4xf32>, vector<4x128xf32>, vector<8x128xf32> -> vector<8x128xf32>
    %10 = arith.addf %2, %9 : vector<8x128xf32>
    %c0_7 = arith.constant 0 : index
    %c0_8 = arith.constant 0 : index
    %11 = vector.load %arg5[%c0_7, %c0_8] : memref<8x128xf32, #tpu.memory_space<vmem>>, vector<8x128xf32>
    tpu.vector_store %arg5[%c0_7, %c0_8], %10 {strides = array<i32>} : memref<8x128xf32, #tpu.memory_space<vmem>>, vector<8x128xf32>,
    %12 = arith.mulf %7, %7 : vector<8x4xf32>
    %cst_9 = arith.constant 1.000000e+00 : f32
    %13 = vector.broadcast %cst_9 : f32 to vector<8x4xf32>
    %14 = arith.subf %13, %12 : vector<8x4xf32>
    %15 = vector.broadcast %1 : f32 to vector<8x4xf32>
    %16 = arith.mulf %14, %15 : vector<8x4xf32>
    %cst_10 = arith.constant 1.000000e+00 : f32
    %17 = vector.broadcast %cst_10 : f32 to vector<8x4xf32>
    %18 = arith.addf %17, %16 : vector<8x4xf32>
    %19 = math.absf %18 : vector<8x4xf32>
    %cst_11 = arith.constant 9.99999993E-9 : f32
    %20 = vector.broadcast %cst_11 : f32 to vector<8x4xf32>
    %21 = arith.addf %19, %20 : vector<8x4xf32>
    %22 = math.log %21 : vector<8x4xf32>
    %c0_12 = arith.constant 0 : index
    %c0_13 = arith.constant 0 : index
    %23 = vector.load %arg6[%c0_12, %c0_13] : memref<8x4xf32, #tpu.memory_space<vmem>>, vector<8x4xf32>
    tpu.vector_store %arg6[%c0_12, %c0_13], %22 {strides = array<i32>} : memref<8x4xf32, #tpu.memory_space<vmem>>, vector<8x4xf32>,
    return
  }
  func.func @transform_0(%arg0: i32) -> i32 {
    %c0_i32 = arith.constant 0 : i32
    %c0_i32_0 = arith.constant 0 : i32
    return %c0_i32 : i32
  }
  func.func @transform_1(%arg0: i32) -> (i32, i32) {
    %c0_i32 = arith.constant 0 : i32
    %c0_i32_0 = arith.constant 0 : i32
    return %arg0, %c0_i32 : i32, i32
  }
  func.func @transform_2(%arg0: i32) -> (i32, i32) {
    %c0_i32 = arith.constant 0 : i32
    %c0_i32_0 = arith.constant 0 : i32
    %c0_i32_1 = arith.constant 0 : i32
    return %c0_i32, %c0_i32_0 : i32, i32
  }
  func.func @transform_3(%arg0: i32) -> (i32, i32) {
    %c0_i32 = arith.constant 0 : i32
    %c0_i32_0 = arith.constant 0 : i32
    %c0_i32_1 = arith.constant 0 : i32
    return %c0_i32, %c0_i32_0 : i32, i32
  }
  func.func @transform_4(%arg0: i32) -> (i32, i32) {
    %c0_i32 = arith.constant 0 : i32
    %c0_i32_0 = arith.constant 0 : i32
    return %arg0, %c0_i32 : i32, i32
  }
  func.func @transform_5(%arg0: i32) -> (i32, i32) {
    %c0_i32 = arith.constant 0 : i32
    %c0_i32_0 = arith.constant 0 : i32
    return %arg0, %c0_i32 : i32, i32
  }
}

</mosaic_0001>

<llo_original>
// kernel: tpu_custom_call.1
$region0: #{tpu_custom_call.1}
  #allocation0 [shape = 'u32[]', space=smem, size = 0x4, offset = 0x4, fixed_abs, tag = 'smem constant byte address 0x4 - core index']
  #allocation1 [shape = 'u32[144,128]{1,0:T(1,128)}', space=vmem, size = 0x12000, scoped, tag = 'internal scratch']
  %s0 = inlined_call_operand.vmem [shape: f32[2], index: 0, kind: input, shape index: {}]
  %s1 = inlined_call_operand.vmem [shape: f32[8,128], index: 1, kind: input, shape index: {}]
  %s2 = inlined_call_operand.vmem [shape: f32[128,4], index: 2, kind: input, shape index: {}]
  %s3 = inlined_call_operand.vmem [shape: f32[4,128], index: 3, kind: input, shape index: {}]
  %s4 = inlined_call_operand.hbm [shape: f32[8,128], index: 4, kind: output, shape index: {0}]
  %s5 = inlined_call_operand.vmem [shape: f32[8,4], index: 5, kind: output, shape index: {1}]
  %6 = xla_tuple %s4, %s5
  %s7 = sld [smem:[#allocation0]]
  $region38: #{tpu_custom_call.1} parent=0
    _
  %s9 = ssub.s32 1, %s7
  %s10 = scalar_select 0, %s9, %s7
  $region1: #{tpu_custom_call.1} parent=0
    #allocation2 [shape = 'u8[512]{0}', space=smem, size = 0x200, scoped, tag = 'input window, operand 0, single buffered']
    #allocation3 [shape = 's32[1]{0}', space=sflag, size = 0x4, scoped, tag = 'scoped memory for tpu_custom_call.1']
    #allocation4 [shape = 's32[1]{0}', space=sflag, size = 0x4, scoped, tag = 'scoped memory for tpu_custom_call.1']
    #allocation5 [shape = 'u8[4096]{0}', space=vmem, size = 0x1000, scoped, tag = 'output window, operand 0, single buffered']
    %11 = vsyncpa [#allocation4], 0
    %12 = vsyncpa [#allocation3], 0
    // Predicated region
    $region2: #{tpu_custom_call.1} parent=1 // pred_check
      _
    $region3: #{tpu_custom_call.1} parent=1 // pred_check_branch
      %14 = sbr.rel (0) target = $region5
    $region4: #{tpu_custom_call.1} parent=1 // pred_region
      %s16 = ssub.s32 16, 16
      %17 = vsyncadd [#allocation4], %s16
      %s19 = sshll.u32 %s0, 4
      %s20 = int_to_ptr.vmem [resolvable:$true] %s19
      %22 = dma.vmem_to_smem %s20, 16, [#allocation2], [#allocation4]
    $region5: #{tpu_custom_call.1} parent=1 // pred_fallthru
      _
    // Predicated region
    $region6: #{tpu_custom_call.1} parent=1 // pred_check
      _
    $region7: #{tpu_custom_call.1} parent=1 // pred_check_branch
      %24 = sbr.rel (0) target = $region9
    $region8: #{tpu_custom_call.1} parent=1 // pred_region
      _
    $region9: #{tpu_custom_call.1} parent=1 // pred_fallthru
      _
    // Predicated region
    $region10: #{tpu_custom_call.1} parent=1 // pred_check
      _
    $region11: #{tpu_custom_call.1} parent=1 // pred_check_branch
      %26 = sbr.rel (0) target = $region13
    $region12: #{tpu_custom_call.1} parent=1 // pred_region
      _
    $region13: #{tpu_custom_call.1} parent=1 // pred_fallthru
      _
    // Predicated region
    $region14: #{tpu_custom_call.1} parent=1 // pred_check
      _
    $region15: #{tpu_custom_call.1} parent=1 // pred_check_branch
      %28 = sbr.rel (0) target = $region17
    $region16: #{tpu_custom_call.1} parent=1 // pred_region
      _
    $region17: #{tpu_custom_call.1} parent=1 // pred_fallthru
      _
    // Predicated region
    $region18: #{tpu_custom_call.1} parent=1 // pred_check
      _
    $region19: #{tpu_custom_call.1} parent=1 // pred_check_branch
      %30 = sbr.rel (0) target = $region21
    $region20: #{tpu_custom_call.1} parent=1 // pred_region
      %31 = dma.done [#allocation4], 16
    $region21: #{tpu_custom_call.1} parent=1 // pred_fallthru
      _
    %32 = sfence
    %s33 = sld [smem:[#allocation2]]
    %s34 = sld [smem:[#allocation2 + $0x1]]
    %v35 = vld [vmem:[%s1] sm:$0xff]
    %v36 = vld [vmem:[%s2] sm:$0xff]
    %v37 = vld [vmem:[%s2 + $0x8] sm:$0xff]
    %v38 = vld [vmem:[%s2 + $0x10] sm:$0xff]
    %v39 = vld [vmem:[%s2 + $0x18] sm:$0xff]
    %v40 = vld [vmem:[%s2 + $0x20] sm:$0xff]
    %v41 = vld [vmem:[%s2 + $0x28] sm:$0xff]
    %v42 = vld [vmem:[%s2 + $0x30] sm:$0xff]
    %v43 = vld [vmem:[%s2 + $0x38] sm:$0xff]
    %v44 = vld [vmem:[%s2 + $0x40] sm:$0xff]
    %v45 = vld [vmem:[%s2 + $0x48] sm:$0xff]
    %v46 = vld [vmem:[%s2 + $0x50] sm:$0xff]
    %v47 = vld [vmem:[%s2 + $0x58] sm:$0xff]
    %v48 = vld [vmem:[%s2 + $0x60] sm:$0xff]
    %v49 = vld [vmem:[%s2 + $0x68] sm:$0xff]
    %v50 = vld [vmem:[%s2 + $0x70] sm:$0xff]
    %v51 = vld [vmem:[%s2 + $0x78] sm:$0xff]
    %v52 = vstv %s33
    %53 = vmatprep.subr.mxu0 0.0
    %v54 = vand.u32 %v36, 4294901760
    %55 = vmatpush1.msra.mxu0 %v54
    %56 = vmatprep.subr.mxu0 0.0
    %v57 = vand.u32 %v37, 4294901760
    %58 = vmatpush1.msra.mxu0 %v57
    %59 = vmatprep.subr.mxu0 0.0
    %v60 = vand.u32 %v38, 4294901760
    %61 = vmatpush1.msra.mxu0 %v60
    %62 = vmatprep.subr.mxu0 0.0
    %v63 = vand.u32 %v39, 4294901760
    %64 = vmatpush1.msra.mxu0 %v63
    %65 = vmatprep.subr.mxu0 0.0
    %v66 = vand.u32 %v40, 4294901760
    %67 = vmatpush1.msra.mxu0 %v66
    %68 = vmatprep.subr.mxu0 0.0
    %v69 = vand.u32 %v41, 4294901760
    %70 = vmatpush1.msra.mxu0 %v69
    %71 = vmatprep.subr.mxu0 0.0
    %v72 = vand.u32 %v42, 4294901760
    %73 = vmatpush1.msra.mxu0 %v72
    %74 = vmatprep.subr.mxu0 0.0
    %v75 = vand.u32 %v43, 4294901760
    %76 = vmatpush1.msra.mxu0 %v75
    %77 = vmatprep.subr.mxu0 0.0
    %v78 = vand.u32 %v44, 4294901760
    %79 = vmatpush1.msra.mxu0 %v78
    %80 = vmatprep.subr.mxu0 0.0
    %v81 = vand.u32 %v45, 4294901760
    %82 = vmatpush1.msra.mxu0 %v81
    %83 = vmatprep.subr.mxu0 0.0
    %v84 = vand.u32 %v46, 4294901760
    %85 = vmatpush1.msra.mxu0 %v84
    %86 = vmatprep.subr.mxu0 0.0
    %v87 = vand.u32 %v47, 4294901760
    %88 = vmatpush1.msra.mxu0 %v87
    %89 = vmatprep.subr.mxu0 0.0
    %v90 = vand.u32 %v48, 4294901760
    %91 = vmatpush1.msra.mxu0 %v90
    %92 = vmatprep.subr.mxu0 0.0
    %v93 = vand.u32 %v49, 4294901760
    %94 = vmatpush1.msra.mxu0 %v93
    %95 = vmatprep.subr.mxu0 0.0
    %v96 = vand.u32 %v50, 4294901760
    %97 = vmatpush1.msra.mxu0 %v96
    %98 = vmatprep.subr.mxu0 0.0
    %v99 = vand.u32 %v51, 4294901760
    %100 = vmatpush1.msra.mxu0 %v99
    %101 = vmatprep.subr.mxu0 0.0
    %102 = vmatpush1.msra.mxu0 0.0
    %103 = vmatprep.subr.mxu0 0.0
    %104 = vmatpush1.msra.mxu0 0.0
    %105 = vmatprep.subr.mxu0 0.0
    %106 = vmatpush1.msra.mxu0 0.0
    %107 = vmatprep.subr.mxu0 0.0
    %108 = vmatpush1.msra.mxu0 0.0
    %109 = vmatprep.subr.mxu0 0.0
    %110 = vmatpush1.msra.mxu0 0.0
    %111 = vmatprep.subr.mxu0 0.0
    %112 = vmatpush1.msra.mxu0 0.0
    %113 = vmatprep.subr.mxu0 0.0
    %114 = vmatpush1.msra.mxu0 0.0
    %115 = vmatprep.subr.mxu0 0.0
    %116 = vmatpush1.msra.mxu0 0.0
    %117 = vmatprep.subr.mxu0 0.0
    %118 = vmatpush1.msra.mxu0 0.0
    %119 = vmatprep.subr.mxu0 0.0
    %120 = vmatpush1.msra.mxu0 0.0
    %121 = vmatprep.subr.mxu0 0.0
    %122 = vmatpush1.msra.mxu0 0.0
    %123 = vmatprep.subr.mxu0 0.0
    %124 = vmatpush1.msra.mxu0 0.0
    %125 = vmatprep.subr.mxu0 0.0
    %126 = vmatpush1.msra.mxu0 0.0
    %127 = vmatprep.subr.mxu0 0.0
    %128 = vmatpush1.msra.mxu0 0.0
    %129 = vmatprep.subr.mxu0 0.0
    %130 = vmatpush1.msra.mxu0 0.0
    %131 = vmatprep.subr.mxu0 0.0
    %132 = vmatpush1.msra.mxu0 0.0
    %133 = vmatprep.mubr.f32.mxu0 0.0
    %v134 = vand.u32 %v35, 4294901760
    %v135 = vsub.f32 %v35, %v134
    %v136 = vand.u32 %v135, 4294901760
    %v137 = vsub.f32 %v135, %v136
    %v138 = vand.u32 %v137, 4294901760
    %139 = vmatmul.mubr.f32.gmra.mrb[0].mxu0 %v138
    %v140 = vpop.f32.mrb[0].mxu0
    %v141 = vadd.f32 %v52, %v140
    %v142 = vpop.f32.mrb[0].mxu0
    %143 = vdwg.mxu0
    %144 = vmatprep.subr.mxu0 0.0
    %v145 = vand.u32 %v36, 4294901760
    %v146 = vsub.f32 %v36, %v145
    %v147 = vand.u32 %v146, 4294901760
    %v148 = vsub.f32 %v146, %v147
    %v149 = vand.u32 %v148, 4294901760
    %150 = vmatpush1.msra.mxu0 %v149
    %151 = vmatprep.subr.mxu0 0.0
    %v152 = vand.u32 %v37, 4294901760
    %v153 = vsub.f32 %v37, %v152
    %v154 = vand.u32 %v153, 4294901760
    %v155 = vsub.f32 %v153, %v154
    %v156 = vand.u32 %v155, 4294901760
    %157 = vmatpush1.msra.mxu0 %v156
    %158 = vmatprep.subr.mxu0 0.0
    %v159 = vand.u32 %v38, 4294901760
    %v160 = vsub.f32 %v38, %v159
    %v161 = vand.u32 %v160, 4294901760
    %v162 = vsub.f32 %v160, %v161
    %v163 = vand.u32 %v162, 4294901760
    %164 = vmatpush1.msra.mxu0 %v163
    %165 = vmatprep.subr.mxu0 0.0
    %v166 = vand.u32 %v39, 4294901760
    %v167 = vsub.f32 %v39, %v166
    %v168 = vand.u32 %v167, 4294901760
    %v169 = vsub.f32 %v167, %v168
    %v170 = vand.u32 %v169, 4294901760
    %171 = vmatpush1.msra.mxu0 %v170
    %172 = vmatprep.subr.mxu0 0.0
    %v173 = vand.u32 %v40, 4294901760
    %v174 = vsub.f32 %v40, %v173
    %v175 = vand.u32 %v174, 4294901760
    %v176 = vsub.f32 %v174, %v175
    %v177 = vand.u32 %v176, 4294901760
    %178 = vmatpush1.msra.mxu0 %v177
    %179 = vmatprep.subr.mxu0 0.0
    %v180 = vand.u32 %v41, 4294901760
    %v181 = vsub.f32 %v41, %v180
    %v182 = vand.u32 %v181, 4294901760
    %v183 = vsub.f32 %v181, %v182
    %v184 = vand.u32 %v183, 4294901760
    %185 = vmatpush1.msra.mxu0 %v184
    %186 = vmatprep.subr.mxu0 0.0
    %v187 = vand.u32 %v42, 4294901760
    %v188 = vsub.f32 %v42, %v187
    %v189 = vand.u32 %v188, 4294901760
    %v190 = vsub.f32 %v188, %v189
    %v191 = vand.u32 %v190, 4294901760
    %192 = vmatpush1.msra.mxu0 %v191
    %193 = vmatprep.subr.mxu0 0.0
    %v194 = vand.u32 %v43, 4294901760
    %v195 = vsub.f32 %v43, %v194
    %v196 = vand.u32 %v195, 4294901760
    %v197 = vsub.f32 %v195, %v196
    %v198 = vand.u32 %v197, 4294901760
    %199 = vmatpush1.msra.mxu0 %v198
    %200 = vmatprep.subr.mxu0 0.0
    %v201 = vand.u32 %v44, 4294901760
    %v202 = vsub.f32 %v44, %v201
    %v203 = vand.u32 %v202, 4294901760
    %v204 = vsub.f32 %v202, %v203
    %v205 = vand.u32 %v204, 4294901760
    %206 = vmatpush1.msra.mxu0 %v205
    %207 = vmatprep.subr.mxu0 0.0
    %v208 = vand.u32 %v45, 4294901760
    %v209 = vsub.f32 %v45, %v208
    %v210 = vand.u32 %v209, 4294901760
    %v211 = vsub.f32 %v209, %v210
    %v212 = vand.u32 %v211, 4294901760
    %213 = vmatpush1.msra.mxu0 %v212
    %214 = vmatprep.subr.mxu0 0.0
    %v215 = vand.u32 %v46, 4294901760
    %v216 = vsub.f32 %v46, %v215
    %v217 = vand.u32 %v216, 4294901760
    %v218 = vsub.f32 %v216, %v217
    %v219 = vand.u32 %v218, 4294901760
    %220 = vmatpush1.msra.mxu0 %v219
    %221 = vmatprep.subr.mxu0 0.0
    %v222 = vand.u32 %v47, 4294901760
    %v223 = vsub.f32 %v47, %v222
    %v224 = vand.u32 %v223, 4294901760
    %v225 = vsub.f32 %v223, %v224
    %v226 = vand.u32 %v225, 4294901760
    %227 = vmatpush1.msra.mxu0 %v226
    %228 = vmatprep.subr.mxu0 0.0
    %v229 = vand.u32 %v48, 4294901760
    %v230 = vsub.f32 %v48, %v229
    %v231 = vand.u32 %v230, 4294901760
    %v232 = vsub.f32 %v230, %v231
    %v233 = vand.u32 %v232, 4294901760
    %234 = vmatpush1.msra.mxu0 %v233
    %235 = vmatprep.subr.mxu0 0.0
    %v236 = vand.u32 %v49, 4294901760
    %v237 = vsub.f32 %v49, %v236
    %v238 = vand.u32 %v237, 4294901760
    %v239 = vsub.f32 %v237, %v238
    %v240 = vand.u32 %v239, 4294901760
    %241 = vmatpush1.msra.mxu0 %v240
    %242 = vmatprep.subr.mxu0 0.0
    %v243 = vand.u32 %v50, 4294901760
    %v244 = vsub.f32 %v50, %v243
    %v245 = vand.u32 %v244, 4294901760
    %v246 = vsub.f32 %v244, %v245
    %v247 = vand.u32 %v246, 4294901760
    %248 = vmatpush1.msra.mxu0 %v247
    %249 = vmatprep.subr.mxu0 0.0
    %v250 = vand.u32 %v51, 4294901760
    %v251 = vsub.f32 %v51, %v250
    %v252 = vand.u32 %v251, 4294901760
    %v253 = vsub.f32 %v251, %v252
    %v254 = vand.u32 %v253, 4294901760
    %255 = vmatpush1.msra.mxu0 %v254
    %256 = vmatprep.subr.mxu0 0.0
    %257 = vmatpush1.msra.mxu0 0.0
    %258 = vmatprep.subr.mxu0 0.0
    %259 = vmatpush1.msra.mxu0 0.0
    %260 = vmatprep.subr.mxu0 0.0
    %261 = vmatpush1.msra.mxu0 0.0
    %262 = vmatprep.subr.mxu0 0.0
    %263 = vmatpush1.msra.mxu0 0.0
    %264 = vmatprep.subr.mxu0 0.0
    %265 = vmatpush1.msra.mxu0 0.0
    %266 = vmatprep.subr.mxu0 0.0
    %267 = vmatpush1.msra.mxu0 0.0
    %268 = vmatprep.subr.mxu0 0.0
    %269 = vmatpush1.msra.mxu0 0.0
    %270 = vmatprep.subr.mxu0 0.0
    %271 = vmatpush1.msra.mxu0 0.0
    %272 = vmatprep.subr.mxu0 0.0
    %273 = vmatpush1.msra.mxu0 0.0
    %274 = vmatprep.subr.mxu0 0.0
    %275 = vmatpush1.msra.mxu0 0.0
    %276 = vmatprep.subr.mxu0 0.0
    %277 = vmatpush1.msra.mxu0 0.0
    %278 = vmatprep.subr.mxu0 0.0
    %279 = vmatpush1.msra.mxu0 0.0
    %280 = vmatprep.subr.mxu0 0.0
    %281 = vmatpush1.msra.mxu0 0.0
    %282 = vmatprep.subr.mxu0 0.0
    %283 = vmatpush1.msra.mxu0 0.0
    %284 = vmatprep.subr.mxu0 0.0
    %285 = vmatpush1.msra.mxu0 0.0
    %286 = vmatprep.subr.mxu0 0.0
    %287 = vmatpush1.msra.mxu0 0.0
    %288 = vmatprep.mubr.f32.mxu0 0.0
    %v289 = vand.u32 %v35, 4294901760
    %290 = vmatmul.mubr.f32.gmra.mrb[0].mxu0 %v289
    %v291 = vpop.f32.mrb[0].mxu0
    %v292 = vadd.f32 %v141, %v291
    %v293 = vpop.f32.mrb[0].mxu0
    %294 = vdwg.mxu0
    %295 = vmatprep.subr.mxu0 0.0
    %v296 = vand.u32 %v36, 4294901760
    %v297 = vsub.f32 %v36, %v296
    %298 = vmatpush1.msra.mxu0 %v297
    %299 = vmatprep.subr.mxu0 0.0
    %v300 = vand.u32 %v37, 4294901760
    %v301 = vsub.f32 %v37, %v300
    %302 = vmatpush1.msra.mxu0 %v301
    %303 = vmatprep.subr.mxu0 0.0
    %v304 = vand.u32 %v38, 4294901760
    %v305 = vsub.f32 %v38, %v304
    %306 = vmatpush1.msra.mxu0 %v305
    %307 = vmatprep.subr.mxu0 0.0
    %v308 = vand.u32 %v39, 4294901760
    %v309 = vsub.f32 %v39, %v308
    %310 = vmatpush1.msra.mxu0 %v309
    %311 = vmatprep.subr.mxu0 0.0
    %v312 = vand.u32 %v40, 4294901760
    %v313 = vsub.f32 %v40, %v312
    %314 = vmatpush1.msra.mxu0 %v313
    %315 = vmatprep.subr.mxu0 0.0
    %v316 = vand.u32 %v41, 4294901760
    %v317 = vsub.f32 %v41, %v316
    %318 = vmatpush1.msra.mxu0 %v317
    %319 = vmatprep.subr.mxu0 0.0
    %v320 = vand.u32 %v42, 4294901760
    %v321 = vsub.f32 %v42, %v320
    %322 = vmatpush1.msra.mxu0 %v321
    %323 = vmatprep.subr.mxu0 0.0
    %v324 = vand.u32 %v43, 4294901760
    %v325 = vsub.f32 %v43, %v324
    %326 = vmatpush1.msra.mxu0 %v325
    %327 = vmatprep.subr.mxu0 0.0
    %v328 = vand.u32 %v44, 4294901760
    %v329 = vsub.f32 %v44, %v328
    %330 = vmatpush1.msra.mxu0 %v329
    %331 = vmatprep.subr.mxu0 0.0
    %v332 = vand.u32 %v45, 4294901760
    %v333 = vsub.f32 %v45, %v332
    %334 = vmatpush1.msra.mxu0 %v333
    %335 = vmatprep.subr.mxu0 0.0
    %v336 = vand.u32 %v46, 4294901760
    %v337 = vsub.f32 %v46, %v336
    %338 = vmatpush1.msra.mxu0 %v337
    %339 = vmatprep.subr.mxu0 0.0
    %v340 = vand.u32 %v47, 4294901760
    %v341 = vsub.f32 %v47, %v340
    %342 = vmatpush1.msra.mxu0 %v341
    %343 = vmatprep.subr.mxu0 0.0
    %v344 = vand.u32 %v48, 4294901760
    %v345 = vsub.f32 %v48, %v344
    %346 = vmatpush1.msra.mxu0 %v345
    %347 = vmatprep.subr.mxu0 0.0
    %v348 = vand.u32 %v49, 4294901760
    %v349 = vsub.f32 %v49, %v348
    %350 = vmatpush1.msra.mxu0 %v349
    %351 = vmatprep.subr.mxu0 0.0
    %v352 = vand.u32 %v50, 4294901760
    %v353 = vsub.f32 %v50, %v352
    %354 = vmatpush1.msra.mxu0 %v353
    %355 = vmatprep.subr.mxu0 0.0
    %v356 = vand.u32 %v51, 4294901760
    %v357 = vsub.f32 %v51, %v356
    %358 = vmatpush1.msra.mxu0 %v357
    %359 = vmatprep.subr.mxu0 0.0
    %360 = vmatpush1.msra.mxu0 0.0
    %361 = vmatprep.subr.mxu0 0.0
    %362 = vmatpush1.msra.mxu0 0.0
    %363 = vmatprep.subr.mxu0 0.0
    %364 = vmatpush1.msra.mxu0 0.0
    %365 = vmatprep.subr.mxu0 0.0
    %366 = vmatpush1.msra.mxu0 0.0
    %367 = vmatprep.subr.mxu0 0.0
    %368 = vmatpush1.msra.mxu0 0.0
    %369 = vmatprep.subr.mxu0 0.0
    %370 = vmatpush1.msra.mxu0 0.0
    %371 = vmatprep.subr.mxu0 0.0
    %372 = vmatpush1.msra.mxu0 0.0
    %373 = vmatprep.subr.mxu0 0.0
    %374 = vmatpush1.msra.mxu0 0.0
    %375 = vmatprep.subr.mxu0 0.0
    %376 = vmatpush1.msra.mxu0 0.0
    %377 = vmatprep.subr.mxu0 0.0
    %378 = vmatpush1.msra.mxu0 0.0
    %379 = vmatprep.subr.mxu0 0.0
    %380 = vmatpush1.msra.mxu0 0.0
    %381 = vmatprep.subr.mxu0 0.0
    %382 = vmatpush1.msra.mxu0 0.0
    %383 = vmatprep.subr.mxu0 0.0
    %384 = vmatpush1.msra.mxu0 0.0
    %385 = vmatprep.subr.mxu0 0.0
    %386 = vmatpush1.msra.mxu0 0.0
    %387 = vmatprep.subr.mxu0 0.0
    %388 = vmatpush1.msra.mxu0 0.0
    %389 = vmatprep.subr.mxu0 0.0
    %390 = vmatpush1.msra.mxu0 0.0
    %391 = vmatprep.mubr.f32.mxu0 0.0
    %v392 = vand.u32 %v35, 4294901760
    %v393 = vsub.f32 %v35, %v392
    %394 = vmatmul.mubr.f32.gmra.mrb[0].mxu0 %v393
    %v395 = vpop.f32.mrb[0].mxu0
    %v396 = vadd.f32 %v292, %v395
    %v397 = vpop.f32.mrb[0].mxu0
    %398 = vdwg.mxu0
    %399 = vmatprep.subr.mxu0 0.0
    %v400 = vand.u32 %v36, 4294901760
    %401 = vmatpush1.msra.mxu0 %v400
    %402 = vmatprep.subr.mxu0 0.0
    %v403 = vand.u32 %v37, 4294901760
    %404 = vmatpush1.msra.mxu0 %v403
    %405 = vmatprep.subr.mxu0 0.0
    %v406 = vand.u32 %v38, 4294901760
    %407 = vmatpush1.msra.mxu0 %v406
    %408 = vmatprep.subr.mxu0 0.0
    %v409 = vand.u32 %v39, 4294901760
    %410 = vmatpush1.msra.mxu0 %v409
    %411 = vmatprep.subr.mxu0 0.0
    %v412 = vand.u32 %v40, 4294901760
    %413 = vmatpush1.msra.mxu0 %v412
    %414 = vmatprep.subr.mxu0 0.0
    %v415 = vand.u32 %v41, 4294901760
    %416 = vmatpush1.msra.mxu0 %v415
    %417 = vmatprep.subr.mxu0 0.0
    %v418 = vand.u32 %v42, 4294901760
    %419 = vmatpush1.msra.mxu0 %v418
    %420 = vmatprep.subr.mxu0 0.0
    %v421 = vand.u32 %v43, 4294901760
    %422 = vmatpush1.msra.mxu0 %v421
    %423 = vmatprep.subr.mxu0 0.0
    %v424 = vand.u32 %v44, 4294901760
    %425 = vmatpush1.msra.mxu0 %v424
    %426 = vmatprep.subr.mxu0 0.0
    %v427 = vand.u32 %v45, 4294901760
    %428 = vmatpush1.msra.mxu0 %v427
    %429 = vmatprep.subr.mxu0 0.0
    %v430 = vand.u32 %v46, 4294901760
    %431 = vmatpush1.msra.mxu0 %v430
    %432 = vmatprep.subr.mxu0 0.0
    %v433 = vand.u32 %v47, 4294901760
    %434 = vmatpush1.msra.mxu0 %v433
    %435 = vmatprep.subr.mxu0 0.0
    %v436 = vand.u32 %v48, 4294901760
    %437 = vmatpush1.msra.mxu0 %v436
    %438 = vmatprep.subr.mxu0 0.0
    %v439 = vand.u32 %v49, 4294901760
    %440 = vmatpush1.msra.mxu0 %v439
    %441 = vmatprep.subr.mxu0 0.0
    %v442 = vand.u32 %v50, 4294901760
    %443 = vmatpush1.msra.mxu0 %v442
    %444 = vmatprep.subr.mxu0 0.0
    %v445 = vand.u32 %v51, 4294901760
    %446 = vmatpush1.msra.mxu0 %v445
    %447 = vmatprep.subr.mxu0 0.0
    %448 = vmatpush1.msra.mxu0 0.0
    %449 = vmatprep.subr.mxu0 0.0
    %450 = vmatpush1.msra.mxu0 0.0
    %451 = vmatprep.subr.mxu0 0.0
    %452 = vmatpush1.msra.mxu0 0.0
    %453 = vmatprep.subr.mxu0 0.0
    %454 = vmatpush1.msra.mxu0 0.0
    %455 = vmatprep.subr.mxu0 0.0
    %456 = vmatpush1.msra.mxu0 0.0
    %457 = vmatprep.subr.mxu0 0.0
    %458 = vmatpush1.msra.mxu0 0.0
    %459 = vmatprep.subr.mxu0 0.0
    %460 = vmatpush1.msra.mxu0 0.0
    %461 = vmatprep.subr.mxu0 0.0
    %462 = vmatpush1.msra.mxu0 0.0
    %463 = vmatprep.subr.mxu0 0.0
    %464 = vmatpush1.msra.mxu0 0.0
    %465 = vmatprep.subr.mxu0 0.0
    %466 = vmatpush1.msra.mxu0 0.0
    %467 = vmatprep.subr.mxu0 0.0
    %468 = vmatpush1.msra.mxu0 0.0
    %469 = vmatprep.subr.mxu0 0.0
    %470 = vmatpush1.msra.mxu0 0.0
    %471 = vmatprep.subr.mxu0 0.0
    %472 = vmatpush1.msra.mxu0 0.0
    %473 = vmatprep.subr.mxu0 0.0
    %474 = vmatpush1.msra.mxu0 0.0
    %475 = vmatprep.subr.mxu0 0.0
    %476 = vmatpush1.msra.mxu0 0.0
    %477 = vmatprep.subr.mxu0 0.0
    %478 = vmatpush1.msra.mxu0 0.0
    %479 = vmatprep.mubr.f32.mxu0 0.0
    %v480 = vand.u32 %v35, 4294901760
    %v481 = vsub.f32 %v35, %v480
    %v482 = vand.u32 %v481, 4294901760
    %483 = vmatmul.mubr.f32.gmra.mrb[0].mxu0 %v482
    %v484 = vpop.f32.mrb[0].mxu0
    %v485 = vadd.f32 %v396, %v484
    %v486 = vpop.f32.mrb[0].mxu0
    %487 = vdwg.mxu0
    %488 = vmatprep.subr.mxu0 0.0
    %v489 = vand.u32 %v36, 4294901760
    %v490 = vsub.f32 %v36, %v489
    %v491 = vand.u32 %v490, 4294901760
    %492 = vmatpush1.msra.mxu0 %v491
    %493 = vmatprep.subr.mxu0 0.0
    %v494 = vand.u32 %v37, 4294901760
    %v495 = vsub.f32 %v37, %v494
    %v496 = vand.u32 %v495, 4294901760
    %497 = vmatpush1.msra.mxu0 %v496
    %498 = vmatprep.subr.mxu0 0.0
    %v499 = vand.u32 %v38, 4294901760
    %v500 = vsub.f32 %v38, %v499
    %v501 = vand.u32 %v500, 4294901760
    %502 = vmatpush1.msra.mxu0 %v501
    %503 = vmatprep.subr.mxu0 0.0
    %v504 = vand.u32 %v39, 4294901760
    %v505 = vsub.f32 %v39, %v504
    %v506 = vand.u32 %v505, 4294901760
    %507 = vmatpush1.msra.mxu0 %v506
    %508 = vmatprep.subr.mxu0 0.0
    %v509 = vand.u32 %v40, 4294901760
    %v510 = vsub.f32 %v40, %v509
    %v511 = vand.u32 %v510, 4294901760
    %512 = vmatpush1.msra.mxu0 %v511
    %513 = vmatprep.subr.mxu0 0.0
    %v514 = vand.u32 %v41, 4294901760
    %v515 = vsub.f32 %v41, %v514
    %v516 = vand.u32 %v515, 4294901760
    %517 = vmatpush1.msra.mxu0 %v516
    %518 = vmatprep.subr.mxu0 0.0
    %v519 = vand.u32 %v42, 4294901760
    %v520 = vsub.f32 %v42, %v519
    %v521 = vand.u32 %v520, 4294901760
    %522 = vmatpush1.msra.mxu0 %v521
    %523 = vmatprep.subr.mxu0 0.0
    %v524 = vand.u32 %v43, 4294901760
    %v525 = vsub.f32 %v43, %v524
    %v526 = vand.u32 %v525, 4294901760
    %527 = vmatpush1.msra.mxu0 %v526
    %528 = vmatprep.subr.mxu0 0.0
    %v529 = vand.u32 %v44, 4294901760
    %v530 = vsub.f32 %v44, %v529
    %v531 = vand.u32 %v530, 4294901760
    %532 = vmatpush1.msra.mxu0 %v531
    %533 = vmatprep.subr.mxu0 0.0
    %v534 = vand.u32 %v45, 4294901760
    %v535 = vsub.f32 %v45, %v534
    %v536 = vand.u32 %v535, 4294901760
    %537 = vmatpush1.msra.mxu0 %v536
    %538 = vmatprep.subr.mxu0 0.0
    %v539 = vand.u32 %v46, 4294901760
    %v540 = vsub.f32 %v46, %v539
    %v541 = vand.u32 %v540, 4294901760
    %542 = vmatpush1.msra.mxu0 %v541
    %543 = vmatprep.subr.mxu0 0.0
    %v544 = vand.u32 %v47, 4294901760
    %v545 = vsub.f32 %v47, %v544
    %v546 = vand.u32 %v545, 4294901760
    %547 = vmatpush1.msra.mxu0 %v546
    %548 = vmatprep.subr.mxu0 0.0
    %v549 = vand.u32 %v48, 4294901760
    %v550 = vsub.f32 %v48, %v549
    %v551 = vand.u32 %v550, 4294901760
    %552 = vmatpush1.msra.mxu0 %v551
    %553 = vmatprep.subr.mxu0 0.0
    %v554 = vand.u32 %v49, 4294901760
    %v555 = vsub.f32 %v49, %v554
    %v556 = vand.u32 %v555, 4294901760
    %557 = vmatpush1.msra.mxu0 %v556
    %558 = vmatprep.subr.mxu0 0.0
    %v559 = vand.u32 %v50, 4294901760
    %v560 = vsub.f32 %v50, %v559
    %v561 = vand.u32 %v560, 4294901760
    %562 = vmatpush1.msra.mxu0 %v561
    %563 = vmatprep.subr.mxu0 0.0
    %v564 = vand.u32 %v51, 4294901760
    %v565 = vsub.f32 %v51, %v564
    %v566 = vand.u32 %v565, 4294901760
    %567 = vmatpush1.msra.mxu0 %v566
    %568 = vmatprep.subr.mxu0 0.0
    %569 = vmatpush1.msra.mxu0 0.0
    %570 = vmatprep.subr.mxu0 0.0
    %571 = vmatpush1.msra.mxu0 0.0
    %572 = vmatprep.subr.mxu0 0.0
    %573 = vmatpush1.msra.mxu0 0.0
    %574 = vmatprep.subr.mxu0 0.0
    %575 = vmatpush1.msra.mxu0 0.0
    %576 = vmatprep.subr.mxu0 0.0
    %577 = vmatpush1.msra.mxu0 0.0
    %578 = vmatprep.subr.mxu0 0.0
    %579 = vmatpush1.msra.mxu0 0.0
    %580 = vmatprep.subr.mxu0 0.0
    %581 = vmatpush1.msra.mxu0 0.0
    %582 = vmatprep.subr.mxu0 0.0
    %583 = vmatpush1.msra.mxu0 0.0
    %584 = vmatprep.subr.mxu0 0.0
    %585 = vmatpush1.msra.mxu0 0.0
    %586 = vmatprep.subr.mxu0 0.0
    %587 = vmatpush1.msra.mxu0 0.0
    %588 = vmatprep.subr.mxu0 0.0
    %589 = vmatpush1.msra.mxu0 0.0
    %590 = vmatprep.subr.mxu0 0.0
    %591 = vmatpush1.msra.mxu0 0.0
    %592 = vmatprep.subr.mxu0 0.0
    %593 = vmatpush1.msra.mxu0 0.0
    %594 = vmatprep.subr.mxu0 0.0
    %595 = vmatpush1.msra.mxu0 0.0
    %596 = vmatprep.subr.mxu0 0.0
    %597 = vmatpush1.msra.mxu0 0.0
    %598 = vmatprep.subr.mxu0 0.0
    %599 = vmatpush1.msra.mxu0 0.0
    %600 = vmatprep.mubr.f32.mxu0 0.0
    %v601 = vand.u32 %v35, 4294901760
    %602 = vmatmul.mubr.f32.gmra.mrb[0].mxu0 %v601
    %v603 = vpop.f32.mrb[0].mxu0
    %v604 = vadd.f32 %v485, %v603
    %v605 = vpop.f32.mrb[0].mxu0
    %606 = vdwg.mxu0
    %607 = vmatprep.subr.mxu0 0.0
    %v608 = vand.u32 %v36, 4294901760
    %609 = vmatpush1.msra.mxu0 %v608
    %610 = vmatprep.subr.mxu0 0.0
    %v611 = vand.u32 %v37, 4294901760
    %612 = vmatpush1.msra.mxu0 %v611
    %613 = vmatprep.subr.mxu0 0.0
    %v614 = vand.u32 %v38, 4294901760
    %615 = vmatpush1.msra.mxu0 %v614
    %616 = vmatprep.subr.mxu0 0.0
    %v617 = vand.u32 %v39, 4294901760
    %618 = vmatpush1.msra.mxu0 %v617
    %619 = vmatprep.subr.mxu0 0.0
    %v620 = vand.u32 %v40, 4294901760
    %621 = vmatpush1.msra.mxu0 %v620
    %622 = vmatprep.subr.mxu0 0.0
    %v623 = vand.u32 %v41, 4294901760
    %624 = vmatpush1.msra.mxu0 %v623
    %625 = vmatprep.subr.mxu0 0.0
    %v626 = vand.u32 %v42, 4294901760
    %627 = vmatpush1.msra.mxu0 %v626
    %628 = vmatprep.subr.mxu0 0.0
    %v629 = vand.u32 %v43, 4294901760
    %630 = vmatpush1.msra.mxu0 %v629
    %631 = vmatprep.subr.mxu0 0.0
    %v632 = vand.u32 %v44, 4294901760
    %633 = vmatpush1.msra.mxu0 %v632
    %634 = vmatprep.subr.mxu0 0.0
    %v635 = vand.u32 %v45, 4294901760
    %636 = vmatpush1.msra.mxu0 %v635
    %637 = vmatprep.subr.mxu0 0.0
    %v638 = vand.u32 %v46, 4294901760
    %639 = vmatpush1.msra.mxu0 %v638
    %640 = vmatprep.subr.mxu0 0.0
    %v641 = vand.u32 %v47, 4294901760
    %642 = vmatpush1.msra.mxu0 %v641
    %643 = vmatprep.subr.mxu0 0.0
    %v644 = vand.u32 %v48, 4294901760
    %645 = vmatpush1.msra.mxu0 %v644
    %646 = vmatprep.subr.mxu0 0.0
    %v647 = vand.u32 %v49, 4294901760
    %648 = vmatpush1.msra.mxu0 %v647
    %649 = vmatprep.subr.mxu0 0.0
    %v650 = vand.u32 %v50, 4294901760
    %651 = vmatpush1.msra.mxu0 %v650
    %652 = vmatprep.subr.mxu0 0.0
    %v653 = vand.u32 %v51, 4294901760
    %654 = vmatpush1.msra.mxu0 %v653
    %655 = vmatprep.subr.mxu0 0.0
    %656 = vmatpush1.msra.mxu0 0.0
    %657 = vmatprep.subr.mxu0 0.0
    %658 = vmatpush1.msra.mxu0 0.0
    %659 = vmatprep.subr.mxu0 0.0
    %660 = vmatpush1.msra.mxu0 0.0
    %661 = vmatprep.subr.mxu0 0.0
    %662 = vmatpush1.msra.mxu0 0.0
    %663 = vmatprep.subr.mxu0 0.0
    %664 = vmatpush1.msra.mxu0 0.0
    %665 = vmatprep.subr.mxu0 0.0
    %666 = vmatpush1.msra.mxu0 0.0
    %667 = vmatprep.subr.mxu0 0.0
    %668 = vmatpush1.msra.mxu0 0.0
    %669 = vmatprep.subr.mxu0 0.0
    %670 = vmatpush1.msra.mxu0 0.0
    %671 = vmatprep.subr.mxu0 0.0
    %672 = vmatpush1.msra.mxu0 0.0
    %673 = vmatprep.subr.mxu0 0.0
    %674 = vmatpush1.msra.mxu0 0.0
    %675 = vmatprep.subr.mxu0 0.0
    %676 = vmatpush1.msra.mxu0 0.0
    %677 = vmatprep.subr.mxu0 0.0
    %678 = vmatpush1.msra.mxu0 0.0
    %679 = vmatprep.subr.mxu0 0.0
    %680 = vmatpush1.msra.mxu0 0.0
    %681 = vmatprep.subr.mxu0 0.0
    %682 = vmatpush1.msra.mxu0 0.0
    %683 = vmatprep.subr.mxu0 0.0
    %684 = vmatpush1.msra.mxu0 0.0
    %685 = vmatprep.subr.mxu0 0.0
    %686 = vmatpush1.msra.mxu0 0.0
    %687 = vmatprep.mubr.f32.mxu0 0.0
    %v688 = vand.u32 %v35, 4294901760
    %689 = vmatmul.mubr.f32.gmra.mrb[0].mxu0 %v688
    %v690 = vpop.f32.mrb[0].mxu0
    %v691 = vadd.f32 %v604, %v690
    %v692 = vpop.f32.mrb[0].mxu0
    %693 = vdwg.mxu0
    %v694 = vtanh.pop %v691
    %v695 = vld [vmem:[%s3] sm:$0xf]
    %vm696 = vcmask 31744
    %v698 = vsel %vm696, %v694, 0
    %vm700 = vcmask 1043456
    %v702 = vsel %vm700, %v695, 0
    %704 = vmatprep.subr.mxu0 0.0
    %v705 = vand.u32 %v702, 4294901760
    %706 = vmatpush1.msra.mxu0 %v705
    %707 = vmatprep.subr.mxu0 0.0
    %708 = vmatpush1.msra.mxu0 0.0
    %709 = vmatprep.subr.mxu0 0.0
    %710 = vmatpush1.msra.mxu0 0.0
    %711 = vmatprep.subr.mxu0 0.0
    %712 = vmatpush1.msra.mxu0 0.0
    %713 = vmatprep.subr.mxu0 0.0
    %714 = vmatpush1.msra.mxu0 0.0
    %715 = vmatprep.subr.mxu0 0.0
    %716 = vmatpush1.msra.mxu0 0.0
    %717 = vmatprep.subr.mxu0 0.0
    %718 = vmatpush1.msra.mxu0 0.0
    %719 = vmatprep.subr.mxu0 0.0
    %720 = vmatpush1.msra.mxu0 0.0
    %721 = vmatprep.subr.mxu0 0.0
    %722 = vmatpush1.msra.mxu0 0.0
    %723 = vmatprep.subr.mxu0 0.0
    %724 = vmatpush1.msra.mxu0 0.0
    %725 = vmatprep.subr.mxu0 0.0
    %726 = vmatpush1.msra.mxu0 0.0
    %727 = vmatprep.subr.mxu0 0.0
    %728 = vmatpush1.msra.mxu0 0.0
    %729 = vmatprep.subr.mxu0 0.0
    %730 = vmatpush1.msra.mxu0 0.0
    %731 = vmatprep.subr.mxu0 0.0
    %732 = vmatpush1.msra.mxu0 0.0
    %733 = vmatprep.subr.mxu0 0.0
    %734 = vmatpush1.msra.mxu0 0.0
    %735 = vmatprep.subr.mxu0 0.0
    %736 = vmatpush1.msra.mxu0 0.0
    %737 = vmatprep.subr.mxu0 0.0
    %738 = vmatpush1.msra.mxu0 0.0
    %739 = vmatprep.subr.mxu0 0.0
    %740 = vmatpush1.msra.mxu0 0.0
    %741 = vmatprep.subr.mxu0 0.0
    %742 = vmatpush1.msra.mxu0 0.0
    %743 = vmatprep.subr.mxu0 0.0
    %744 = vmatpush1.msra.mxu0 0.0
    %745 = vmatprep.subr.mxu0 0.0
    %746 = vmatpush1.msra.mxu0 0.0
    %747 = vmatprep.subr.mxu0 0.0
    %748 = vmatpush1.msra.mxu0 0.0
    %749 = vmatprep.subr.mxu0 0.0
    %750 = vmatpush1.msra.mxu0 0.0
    %751 = vmatprep.subr.mxu0 0.0
    %752 = vmatpush1.msra.mxu0 0.0
    %753 = vmatprep.subr.mxu0 0.0
    %754 = vmatpush1.msra.mxu0 0.0
    %755 = vmatprep.subr.mxu0 0.0
    %756 = vmatpush1.msra.mxu0 0.0
    %757 = vmatprep.subr.mxu0 0.0
    %758 = vmatpush1.msra.mxu0 0.0
    %759 = vmatprep.subr.mxu0 0.0
    %760 = vmatpush1.msra.mxu0 0.0
    %761 = vmatprep.subr.mxu0 0.0
    %762 = vmatpush1.msra.mxu0 0.0
    %763 = vmatprep.subr.mxu0 0.0
    %764 = vmatpush1.msra.mxu0 0.0
    %765 = vmatprep.subr.mxu0 0.0
    %766 = vmatpush1.msra.mxu0 0.0
    %767 = vmatprep.subr.mxu0 0.0
    %768 = vmatpush1.msra.mxu0 0.0
    %769 = vmatprep.mubr.f32.mxu0 0.0
    %v770 = vand.u32 %v698, 4294901760
    %v771 = vsub.f32 %v698, %v770
    %v772 = vand.u32 %v771, 4294901760
    %v773 = vsub.f32 %v771, %v772
    %v774 = vand.u32 %v773, 4294901760
    %775 = vmatmul.mubr.f32.gmra.mrb[0].mxu0 %v774
    %v776 = vpop.f32.mrb[0].mxu0
    %v777 = vadd.f32 0.0, %v776
    %v778 = vpop.f32.mrb[0].mxu0
    %779 = vdwg.mxu0
    %780 = vmatprep.subr.mxu0 0.0
    %v781 = vand.u32 %v702, 4294901760
    %v782 = vsub.f32 %v702, %v781
    %v783 = vand.u32 %v782, 4294901760
    %v784 = vsub.f32 %v782, %v783
    %v785 = vand.u32 %v784, 4294901760
    %786 = vmatpush1.msra.mxu0 %v785
    %787 = vmatprep.subr.mxu0 0.0
    %788 = vmatpush1.msra.mxu0 0.0
    %789 = vmatprep.subr.mxu0 0.0
    %790 = vmatpush1.msra.mxu0 0.0
    %791 = vmatprep.subr.mxu0 0.0
    %792 = vmatpush1.msra.mxu0 0.0
    %793 = vmatprep.subr.mxu0 0.0
    %794 = vmatpush1.msra.mxu0 0.0
    %795 = vmatprep.subr.mxu0 0.0
    %796 = vmatpush1.msra.mxu0 0.0
    %797 = vmatprep.subr.mxu0 0.0
    %798 = vmatpush1.msra.mxu0 0.0
    %799 = vmatprep.subr.mxu0 0.0
    %800 = vmatpush1.msra.mxu0 0.0
    %801 = vmatprep.subr.mxu0 0.0
    %802 = vmatpush1.msra.mxu0 0.0
    %803 = vmatprep.subr.mxu0 0.0
    %804 = vmatpush1.msra.mxu0 0.0
    %805 = vmatprep.subr.mxu0 0.0
    %806 = vmatpush1.msra.mxu0 0.0
    %807 = vmatprep.subr.mxu0 0.0
    %808 = vmatpush1.msra.mxu0 0.0
    %809 = vmatprep.subr.mxu0 0.0
    %810 = vmatpush1.msra.mxu0 0.0
    %811 = vmatprep.subr.mxu0 0.0
    %812 = vmatpush1.msra.mxu0 0.0
    %813 = vmatprep.subr.mxu0 0.0
    %814 = vmatpush1.msra.mxu0 0.0
    %815 = vmatprep.subr.mxu0 0.0
    %816 = vmatpush1.msra.mxu0 0.0
    %817 = vmatprep.subr.mxu0 0.0
    %818 = vmatpush1.msra.mxu0 0.0
    %819 = vmatprep.subr.mxu0 0.0
    %820 = vmatpush1.msra.mxu0 0.0
    %821 = vmatprep.subr.mxu0 0.0
    %822 = vmatpush1.msra.mxu0 0.0
    %823 = vmatprep.subr.mxu0 0.0
    %824 = vmatpush1.msra.mxu0 0.0
    %825 = vmatprep.subr.mxu0 0.0
    %826 = vmatpush1.msra.mxu0 0.0
    %827 = vmatprep.subr.mxu0 0.0
    %828 = vmatpush1.msra.mxu0 0.0
    %829 = vmatprep.subr.mxu0 0.0
    %830 = vmatpush1.msra.mxu0 0.0
    %831 = vmatprep.subr.mxu0 0.0
    %832 = vmatpush1.msra.mxu0 0.0
    %833 = vmatprep.subr.mxu0 0.0
    %834 = vmatpush1.msra.mxu0 0.0
    %835 = vmatprep.subr.mxu0 0.0
    %836 = vmatpush1.msra.mxu0 0.0
    %837 = vmatprep.subr.mxu0 0.0
    %838 = vmatpush1.msra.mxu0 0.0
    %839 = vmatprep.subr.mxu0 0.0
    %840 = vmatpush1.msra.mxu0 0.0
    %841 = vmatprep.subr.mxu0 0.0
    %842 = vmatpush1.msra.mxu0 0.0
    %843 = vmatprep.subr.mxu0 0.0
    %844 = vmatpush1.msra.mxu0 0.0
    %845 = vmatprep.subr.mxu0 0.0
    %846 = vmatpush1.msra.mxu0 0.0
    %847 = vmatprep.subr.mxu0 0.0
    %848 = vmatpush1.msra.mxu0 0.0
    %849 = vmatprep.mubr.f32.mxu0 0.0
    %v850 = vand.u32 %v698, 4294901760
    %851 = vmatmul.mubr.f32.gmra.mrb[0].mxu0 %v850
    %v852 = vpop.f32.mrb[0].mxu0
    %v853 = vadd.f32 %v777, %v852
    %v854 = vpop.f32.mrb[0].mxu0
    %855 = vdwg.mxu0
    %856 = vmatprep.subr.mxu0 0.0
    %v857 = vand.u32 %v702, 4294901760
    %v858 = vsub.f32 %v702, %v857
    %859 = vmatpush1.msra.mxu0 %v858
    %860 = vmatprep.subr.mxu0 0.0
    %861 = vmatpush1.msra.mxu0 0.0
    %862 = vmatprep.subr.mxu0 0.0
    %863 = vmatpush1.msra.mxu0 0.0
    %864 = vmatprep.subr.mxu0 0.0
    %865 = vmatpush1.msra.mxu0 0.0
    %866 = vmatprep.subr.mxu0 0.0
    %867 = vmatpush1.msra.mxu0 0.0
    %868 = vmatprep.subr.mxu0 0.0
    %869 = vmatpush1.msra.mxu0 0.0
    %870 = vmatprep.subr.mxu0 0.0
    %871 = vmatpush1.msra.mxu0 0.0
    %872 = vmatprep.subr.mxu0 0.0
    %873 = vmatpush1.msra.mxu0 0.0
    %874 = vmatprep.subr.mxu0 0.0
    %875 = vmatpush1.msra.mxu0 0.0
    %876 = vmatprep.subr.mxu0 0.0
    %877 = vmatpush1.msra.mxu0 0.0
    %878 = vmatprep.subr.mxu0 0.0
    %879 = vmatpush1.msra.mxu0 0.0
    %880 = vmatprep.subr.mxu0 0.0
    %881 = vmatpush1.msra.mxu0 0.0
    %882 = vmatprep.subr.mxu0 0.0
    %883 = vmatpush1.msra.mxu0 0.0
    %884 = vmatprep.subr.mxu0 0.0
    %885 = vmatpush1.msra.mxu0 0.0
    %886 = vmatprep.subr.mxu0 0.0
    %887 = vmatpush1.msra.mxu0 0.0
    %888 = vmatprep.subr.mxu0 0.0
    %889 = vmatpush1.msra.mxu0 0.0
    %890 = vmatprep.subr.mxu0 0.0
    %891 = vmatpush1.msra.mxu0 0.0
    %892 = vmatprep.subr.mxu0 0.0
    %893 = vmatpush1.msra.mxu0 0.0
    %894 = vmatprep.subr.mxu0 0.0
    %895 = vmatpush1.msra.mxu0 0.0
    %896 = vmatprep.subr.mxu0 0.0
    %897 = vmatpush1.msra.mxu0 0.0
    %898 = vmatprep.subr.mxu0 0.0
    %899 = vmatpush1.msra.mxu0 0.0
    %900 = vmatprep.subr.mxu0 0.0
    %901 = vmatpush1.msra.mxu0 0.0
    %902 = vmatprep.subr.mxu0 0.0
    %903 = vmatpush1.msra.mxu0 0.0
    %904 = vmatprep.subr.mxu0 0.0
    %905 = vmatpush1.msra.mxu0 0.0
    %906 = vmatprep.subr.mxu0 0.0
    %907 = vmatpush1.msra.mxu0 0.0
    %908 = vmatprep.subr.mxu0 0.0
    %909 = vmatpush1.msra.mxu0 0.0
    %910 = vmatprep.subr.mxu0 0.0
    %911 = vmatpush1.msra.mxu0 0.0
    %912 = vmatprep.subr.mxu0 0.0
    %913 = vmatpush1.msra.mxu0 0.0
    %914 = vmatprep.subr.mxu0 0.0
    %915 = vmatpush1.msra.mxu0 0.0
    %916 = vmatprep.subr.mxu0 0.0
    %917 = vmatpush1.msra.mxu0 0.0
    %918 = vmatprep.subr.mxu0 0.0
    %919 = vmatpush1.msra.mxu0 0.0
    %920 = vmatprep.subr.mxu0 0.0
    %921 = vmatpush1.msra.mxu0 0.0
    %922 = vmatprep.mubr.f32.mxu0 0.0
    %v923 = vand.u32 %v698, 4294901760
    %v924 = vsub.f32 %v698, %v923
    %925 = vmatmul.mubr.f32.gmra.mrb[0].mxu0 %v924
    %v926 = vpop.f32.mrb[0].mxu0
    %v927 = vadd.f32 %v853, %v926
    %v928 = vpop.f32.mrb[0].mxu0
    %929 = vdwg.mxu0
    %930 = vmatprep.subr.mxu0 0.0
    %v931 = vand.u32 %v702, 4294901760
    %932 = vmatpush1.msra.mxu0 %v931
    %933 = vmatprep.subr.mxu0 0.0
    %934 = vmatpush1.msra.mxu0 0.0
    %935 = vmatprep.subr.mxu0 0.0
    %936 = vmatpush1.msra.mxu0 0.0
    %937 = vmatprep.subr.mxu0 0.0
    %938 = vmatpush1.msra.mxu0 0.0
    %939 = vmatprep.subr.mxu0 0.0
    %940 = vmatpush1.msra.mxu0 0.0
    %941 = vmatprep.subr.mxu0 0.0
    %942 = vmatpush1.msra.mxu0 0.0
    %943 = vmatprep.subr.mxu0 0.0
    %944 = vmatpush1.msra.mxu0 0.0
    %945 = vmatprep.subr.mxu0 0.0
    %946 = vmatpush1.msra.mxu0 0.0
    %947 = vmatprep.subr.mxu0 0.0
    %948 = vmatpush1.msra.mxu0 0.0
    %949 = vmatprep.subr.mxu0 0.0
    %950 = vmatpush1.msra.mxu0 0.0
    %951 = vmatprep.subr.mxu0 0.0
    %952 = vmatpush1.msra.mxu0 0.0
    %953 = vmatprep.subr.mxu0 0.0
    %954 = vmatpush1.msra.mxu0 0.0
    %955 = vmatprep.subr.mxu0 0.0
    %956 = vmatpush1.msra.mxu0 0.0
    %957 = vmatprep.subr.mxu0 0.0
    %958 = vmatpush1.msra.mxu0 0.0
    %959 = vmatprep.subr.mxu0 0.0
    %960 = vmatpush1.msra.mxu0 0.0
    %961 = vmatprep.subr.mxu0 0.0
    %962 = vmatpush1.msra.mxu0 0.0
    %963 = vmatprep.subr.mxu0 0.0
    %964 = vmatpush1.msra.mxu0 0.0
    %965 = vmatprep.subr.mxu0 0.0
    %966 = vmatpush1.msra.mxu0 0.0
    %967 = vmatprep.subr.mxu0 0.0
    %968 = vmatpush1.msra.mxu0 0.0
    %969 = vmatprep.subr.mxu0 0.0
    %970 = vmatpush1.msra.mxu0 0.0
    %971 = vmatprep.subr.mxu0 0.0
    %972 = vmatpush1.msra.mxu0 0.0
    %973 = vmatprep.subr.mxu0 0.0
    %974 = vmatpush1.msra.mxu0 0.0
    %975 = vmatprep.subr.mxu0 0.0
    %976 = vmatpush1.msra.mxu0 0.0
    %977 = vmatprep.subr.mxu0 0.0
    %978 = vmatpush1.msra.mxu0 0.0
    %979 = vmatprep.subr.mxu0 0.0
    %980 = vmatpush1.msra.mxu0 0.0
    %981 = vmatprep.subr.mxu0 0.0
    %982 = vmatpush1.msra.mxu0 0.0
    %983 = vmatprep.subr.mxu0 0.0
    %984 = vmatpush1.msra.mxu0 0.0
    %985 = vmatprep.subr.mxu0 0.0
    %986 = vmatpush1.msra.mxu0 0.0
    %987 = vmatprep.subr.mxu0 0.0
    %988 = vmatpush1.msra.mxu0 0.0
    %989 = vmatprep.subr.mxu0 0.0
    %990 = vmatpush1.msra.mxu0 0.0
    %991 = vmatprep.subr.mxu0 0.0
    %992 = vmatpush1.msra.mxu0 0.0
    %993 = vmatprep.subr.mxu0 0.0
    %994 = vmatpush1.msra.mxu0 0.0
    %995 = vmatprep.mubr.f32.mxu0 0.0
    %v996 = vand.u32 %v698, 4294901760
    %v997 = vsub.f32 %v698, %v996
    %v998 = vand.u32 %v997, 4294901760
    %999 = vmatmul.mubr.f32.gmra.mrb[0].mxu0 %v998
    %v1000 = vpop.f32.mrb[0].mxu0
    %v1001 = vadd.f32 %v927, %v1000
    %v1002 = vpop.f32.mrb[0].mxu0
    %1003 = vdwg.mxu0
    %1004 = vmatprep.subr.mxu0 0.0
    %v1005 = vand.u32 %v702, 4294901760
    %v1006 = vsub.f32 %v702, %v1005
    %v1007 = vand.u32 %v1006, 4294901760
    %1008 = vmatpush1.msra.mxu0 %v1007
    %1009 = vmatprep.subr.mxu0 0.0
    %1010 = vmatpush1.msra.mxu0 0.0
    %1011 = vmatprep.subr.mxu0 0.0
    %1012 = vmatpush1.msra.mxu0 0.0
    %1013 = vmatprep.subr.mxu0 0.0
    %1014 = vmatpush1.msra.mxu0 0.0
    %1015 = vmatprep.subr.mxu0 0.0
    %1016 = vmatpush1.msra.mxu0 0.0
    %1017 = vmatprep.subr.mxu0 0.0
    %1018 = vmatpush1.msra.mxu0 0.0
    %1019 = vmatprep.subr.mxu0 0.0
    %1020 = vmatpush1.msra.mxu0 0.0
    %1021 = vmatprep.subr.mxu0 0.0
    %1022 = vmatpush1.msra.mxu0 0.0
    %1023 = vmatprep.subr.mxu0 0.0
    %1024 = vmatpush1.msra.mxu0 0.0
    %1025 = vmatprep.subr.mxu0 0.0
    %1026 = vmatpush1.msra.mxu0 0.0
    %1027 = vmatprep.subr.mxu0 0.0
    %1028 = vmatpush1.msra.mxu0 0.0
    %1029 = vmatprep.subr.mxu0 0.0
    %1030 = vmatpush1.msra.mxu0 0.0
    %1031 = vmatprep.subr.mxu0 0.0
    %1032 = vmatpush1.msra.mxu0 0.0
    %1033 = vmatprep.subr.mxu0 0.0
    %1034 = vmatpush1.msra.mxu0 0.0
    %1035 = vmatprep.subr.mxu0 0.0
    %1036 = vmatpush1.msra.mxu0 0.0
    %1037 = vmatprep.subr.mxu0 0.0
    %1038 = vmatpush1.msra.mxu0 0.0
    %1039 = vmatprep.subr.mxu0 0.0
    %1040 = vmatpush1.msra.mxu0 0.0
    %1041 = vmatprep.subr.mxu0 0.0
    %1042 = vmatpush1.msra.mxu0 0.0
    %1043 = vmatprep.subr.mxu0 0.0
    %1044 = vmatpush1.msra.mxu0 0.0
    %1045 = vmatprep.subr.mxu0 0.0
    %1046 = vmatpush1.msra.mxu0 0.0
    %1047 = vmatprep.subr.mxu0 0.0
    %1048 = vmatpush1.msra.mxu0 0.0
    %1049 = vmatprep.subr.mxu0 0.0
    %1050 = vmatpush1.msra.mxu0 0.0
    %1051 = vmatprep.subr.mxu0 0.0
    %1052 = vmatpush1.msra.mxu0 0.0
    %1053 = vmatprep.subr.mxu0 0.0
    %1054 = vmatpush1.msra.mxu0 0.0
    %1055 = vmatprep.subr.mxu0 0.0
    %1056 = vmatpush1.msra.mxu0 0.0
    %1057 = vmatprep.subr.mxu0 0.0
    %1058 = vmatpush1.msra.mxu0 0.0
    %1059 = vmatprep.subr.mxu0 0.0
    %1060 = vmatpush1.msra.mxu0 0.0
    %1061 = vmatprep.subr.mxu0 0.0
    %1062 = vmatpush1.msra.mxu0 0.0
    %1063 = vmatprep.subr.mxu0 0.0
    %1064 = vmatpush1.msra.mxu0 0.0
    %1065 = vmatprep.subr.mxu0 0.0
    %1066 = vmatpush1.msra.mxu0 0.0
    %1067 = vmatprep.subr.mxu0 0.0
    %1068 = vmatpush1.msra.mxu0 0.0
    %1069 = vmatprep.subr.mxu0 0.0
    %1070 = vmatpush1.msra.mxu0 0.0
    %1071 = vmatprep.mubr.f32.mxu0 0.0
    %v1072 = vand.u32 %v698, 4294901760
    %1073 = vmatmul.mubr.f32.gmra.mrb[0].mxu0 %v1072
    %v1074 = vpop.f32.mrb[0].mxu0
    %v1075 = vadd.f32 %v1001, %v1074
    %v1076 = vpop.f32.mrb[0].mxu0
    %1077 = vdwg.mxu0
    %1078 = vmatprep.subr.mxu0 0.0
    %v1079 = vand.u32 %v702, 4294901760
    %1080 = vmatpush1.msra.mxu0 %v1079
    %1081 = vmatprep.subr.mxu0 0.0
    %1082 = vmatpush1.msra.mxu0 0.0
    %1083 = vmatprep.subr.mxu0 0.0
    %1084 = vmatpush1.msra.mxu0 0.0
    %1085 = vmatprep.subr.mxu0 0.0
    %1086 = vmatpush1.msra.mxu0 0.0
    %1087 = vmatprep.subr.mxu0 0.0
    %1088 = vmatpush1.msra.mxu0 0.0
    %1089 = vmatprep.subr.mxu0 0.0
    %1090 = vmatpush1.msra.mxu0 0.0
    %1091 = vmatprep.subr.mxu0 0.0
    %1092 = vmatpush1.msra.mxu0 0.0
    %1093 = vmatprep.subr.mxu0 0.0
    %1094 = vmatpush1.msra.mxu0 0.0
    %1095 = vmatprep.subr.mxu0 0.0
    %1096 = vmatpush1.msra.mxu0 0.0
    %1097 = vmatprep.subr.mxu0 0.0
    %1098 = vmatpush1.msra.mxu0 0.0
    %1099 = vmatprep.subr.mxu0 0.0
    %1100 = vmatpush1.msra.mxu0 0.0
    %1101 = vmatprep.subr.mxu0 0.0
    %1102 = vmatpush1.msra.mxu0 0.0
    %1103 = vmatprep.subr.mxu0 0.0
    %1104 = vmatpush1.msra.mxu0 0.0
    %1105 = vmatprep.subr.mxu0 0.0
    %1106 = vmatpush1.msra.mxu0 0.0
    %1107 = vmatprep.subr.mxu0 0.0
    %1108 = vmatpush1.msra.mxu0 0.0
    %1109 = vmatprep.subr.mxu0 0.0
    %1110 = vmatpush1.msra.mxu0 0.0
    %1111 = vmatprep.subr.mxu0 0.0
    %1112 = vmatpush1.msra.mxu0 0.0
    %1113 = vmatprep.subr.mxu0 0.0
    %1114 = vmatpush1.msra.mxu0 0.0
    %1115 = vmatprep.subr.mxu0 0.0
    %1116 = vmatpush1.msra.mxu0 0.0
    %1117 = vmatprep.subr.mxu0 0.0
    %1118 = vmatpush1.msra.mxu0 0.0
    %1119 = vmatprep.subr.mxu0 0.0
    %1120 = vmatpush1.msra.mxu0 0.0
    %1121 = vmatprep.subr.mxu0 0.0
    %1122 = vmatpush1.msra.mxu0 0.0
    %1123 = vmatprep.subr.mxu0 0.0
    %1124 = vmatpush1.msra.mxu0 0.0
    %1125 = vmatprep.subr.mxu0 0.0
    %1126 = vmatpush1.msra.mxu0 0.0
    %1127 = vmatprep.subr.mxu0 0.0
    %1128 = vmatpush1.msra.mxu0 0.0
    %1129 = vmatprep.subr.mxu0 0.0
    %1130 = vmatpush1.msra.mxu0 0.0
    %1131 = vmatprep.subr.mxu0 0.0
    %1132 = vmatpush1.msra.mxu0 0.0
    %1133 = vmatprep.subr.mxu0 0.0
    %1134 = vmatpush1.msra.mxu0 0.0
    %1135 = vmatprep.subr.mxu0 0.0
    %1136 = vmatpush1.msra.mxu0 0.0
    %1137 = vmatprep.subr.mxu0 0.0
    %1138 = vmatpush1.msra.mxu0 0.0
    %1139 = vmatprep.subr.mxu0 0.0
    %1140 = vmatpush1.msra.mxu0 0.0
    %1141 = vmatprep.subr.mxu0 0.0
    %1142 = vmatpush1.msra.mxu0 0.0
    %1143 = vmatprep.mubr.f32.mxu0 0.0
    %v1144 = vand.u32 %v698, 4294901760
    %1145 = vmatmul.mubr.f32.gmra.mrb[0].mxu0 %v1144
    %v1146 = vpop.f32.mrb[0].mxu0
    %v1147 = vadd.f32 %v1075, %v1146
    %v1148 = vpop.f32.mrb[0].mxu0
    %1149 = vdwg.mxu0
    %v1150 = vadd.f32 %v35, %v1147
    %1151 = vst [vmem:[#allocation5] sm:$0xff] %v1150
    %v1152 = vmul.f32 %v694, %v694
    %v1153 = vsub.f32 1.0, %v1152
    %v1154 = vstv %s34
    %v1155 = vmul.f32 %v1153, %v1154
    %v1156 = vadd.f32 %v1155, 1.0
    %v1157 = vand.u32 2147483647, %v1156
    %v1158 = vadd.f32 %v1157, 1e-08
    %v1159 = vlog2.pop %v1158
    %v1160 = vmul.f32 %v1159, 0.6931472
    %1161 = vst.msk [vmem:[%s5] sm:$0xff] %vm696, %v1160
    // Predicated region
    $region22: #{tpu_custom_call.1} parent=1 // pred_check
      _
    $region23: #{tpu_custom_call.1} parent=1 // pred_check_branch
      %1163 = sbr.rel (0) target = $region25
    $region24: #{tpu_custom_call.1} parent=1 // pred_region
      %s1165 = ssub.s32 128, 128
      %1166 = vsyncadd [#allocation3], %s1165
      %s1168 = sshll.u32 [#allocation5], 4
      %s1169 = int_to_ptr.vmem [resolvable:$true] %s1168
      %1171 = dma.vmem_to_hbm [thread:$0]  %s1169, 128, %s4, [#allocation3]
    $region25: #{tpu_custom_call.1} parent=1 // pred_fallthru
      _
    // Predicated region
    $region26: #{tpu_custom_call.1} parent=1 // pred_check
      _
    $region27: #{tpu_custom_call.1} parent=1 // pred_check_branch
      %1173 = sbr.rel (0) target = $region29
    $region28: #{tpu_custom_call.1} parent=1 // pred_region
      _
    $region29: #{tpu_custom_call.1} parent=1 // pred_fallthru
      _
    // Predicated region
    $region30: #{tpu_custom_call.1} parent=1 // pred_check
      _
    $region31: #{tpu_custom_call.1} parent=1 // pred_check_branch
      %1175 = sbr.rel (0) target = $region33
    $region32: #{tpu_custom_call.1} parent=1 // pred_region
      %1176 = dma.done [#allocation3], 128
    $region33: #{tpu_custom_call.1} parent=1 // pred_fallthru
      _
    // Predicated region
    $region34: #{tpu_custom_call.1} parent=1 // pred_check
      _
    $region35: #{tpu_custom_call.1} parent=1 // pred_check_branch
      %1178 = sbr.rel (0) target = $region37
    $region36: #{tpu_custom_call.1} parent=1 // pred_region
      _
    $region37: #{tpu_custom_call.1} parent=1 // pred_fallthru
      _
    %1179 = vsyncpa [#allocation3], 1
    %1180 = vsyncpa [#allocation4], 1

</llo_original>
